<compile_context>
chip_gen: v5e
topology: v5e:2x2
jax: 0.10.0
libtpu: 0.0.40
codegen_flags: <defaults>
</compile_context>

<pallas_src>
import math

import jax
import jax.numpy as jnp
from jax.experimental import pallas as pl
from jax.experimental.pallas import tpu as pltpu


def _round_up(x, m):
    return ((x + m - 1) // m) * m


def _pick_tile(n, candidates=(512, 256, 128)):
    """Largest tile from `candidates` dividing n, else full extent."""
    for t in candidates:
        if n % t == 0:
            return t
    return n


def mesh_conv_kernel(adj_ref, ft_ref, w_ref, b_ref, o_ref, acc_ref):
    # adj_ref: (1, TILE_M, TILE_K)  bf16   -- dominant HBM stream
    # ft_ref : (1, TILE_K, C_in)    bf16
    # w_ref  : (C_in, C_pad)        f32    -- tiny, resident
    # b_ref  : (1, C_pad)           f32
    # o_ref  : (1, TILE_M, C_pad)          -- lane-dense (C_pad % 128 == 0)
    # acc_ref: (TILE_M, C_in)       f32    -- resident across the K axis
    k = pl.program_id(2)

    @pl.when(k == 0)
    def _init():
        acc_ref[...] = jnp.zeros_like(acc_ref)

    # Reassociated form: accumulate (adj @ ft) over the N contraction tiles.
    acc_ref[...] += jnp.dot(adj_ref[0], ft_ref[0],
                            preferred_element_type=jnp.float32)

    @pl.when(k == pl.num_programs(2) - 1)
    def _finalize():
        # Tiny projection + bias + ReLU epilogue, all in f32.
        x = jnp.dot(acc_ref[...], w_ref[...],
                    preferred_element_type=jnp.float32)
        x = x + b_ref[...]
        o_ref[0] = jnp.maximum(x, 0.0).astype(o_ref.dtype)


def mesh_conv(ft, adj, weight, bias, *, compute_dtype=jnp.bfloat16):
    """relu(adj @ (ft @ W) + b)  ==  MeshConv forward."""
    B, N, C_in = ft.shape
    C_out = weight.shape[1]
    assert adj.shape == (B, N, N)
    assert weight.shape == (C_in, C_out)
    assert bias.shape == (C_out,)

    out_dtype = ft.dtype

    # Lane-dense output slab: pad C_out to a multiple of 128, slice afterwards.
    C_pad = _round_up(C_out, 128)
    w_pad = jnp.zeros((C_in, C_pad), jnp.float32).at[:, :C_out].set(
        weight.astype(jnp.float32))
    b_pad = jnp.zeros((1, C_pad), jnp.float32).at[0, :C_out].set(
        bias.astype(jnp.float32))

    # bf16 on the MXU inputs (halves adj HBM traffic); accumulate in f32.
    adj_c = adj.astype(compute_dtype)
    ft_c = ft.astype(compute_dtype)

    tile_m = _pick_tile(N)
    tile_k = _pick_tile(N)
    n_m = N // tile_m
    n_k = N // tile_k

    out_padded = pl.pallas_call(
        mesh_conv_kernel,
        out_shape=jax.ShapeDtypeStruct((B, N, C_pad), out_dtype),
        grid_spec=pltpu.PrefetchScalarGridSpec(
            num_scalar_prefetch=0,
            grid=(B, n_m, n_k),
            in_specs=[
                # adj tile: (1, TILE_M, TILE_K)
                pl.BlockSpec((1, tile_m, tile_k), lambda b, m, k: (b, m, k)),
                # ft tile: (1, TILE_K, C_in)
                pl.BlockSpec((1, tile_k, C_in), lambda b, m, k: (b, k, 0)),
                # weight / bias: whole (tiny), constant across the grid
                pl.BlockSpec((C_in, C_pad), lambda b, m, k: (0, 0)),
                pl.BlockSpec((1, C_pad), lambda b, m, k: (0, 0)),
            ],
            # Output block constant across k -> accumulator-resident output.
            out_specs=pl.BlockSpec((1, tile_m, C_pad),
                                   lambda b, m, k: (b, m, 0)),
            scratch_shapes=[pltpu.VMEM((tile_m, C_in), jnp.float32)],
        ),
        compiler_params=pltpu.CompilerParams(
            dimension_semantics=("parallel", "parallel", "arbitrary")),
    )(adj_c, ft_c, w_pad, b_pad)

    return out_padded[..., :C_out]


def init_mesh_conv_params(key, in_ch, out_ch, dtype=jnp.float32):
    """Deterministic init mimicking the PyTorch module:
    stdv = 1/sqrt(out_ch); weight, bias ~ U(-stdv, stdv)."""
    kw, kb = jax.random.split(key)
    stdv = 1.0 / math.sqrt(out_ch)
    weight = jax.random.uniform(kw, (in_ch, out_ch), dtype,
                                minval=-stdv, maxval=stdv)
    bias = jax.random.uniform(kb, (out_ch,), dtype,
                              minval=-stdv, maxval=stdv)
    return weight, bias


def mesh_conv_reference(ft, adj, weight, bias):
    # pure-JAX f32 reference for correctness
    support = jnp.einsum("bnc,co->bno", ft, weight)
    x = jnp.einsum("bnm,bmo->bno", adj, support) + bias
    return jnp.maximum(x, 0.0)


if __name__ == "__main__":
    B, N, C_in, C_out = 2, 16, 4, 32

    key = jax.random.PRNGKey(0)
    k_ft, k_adj, k_par = jax.random.split(key, 3)

    ft = jax.random.normal(k_ft, (B, N, C_in), dtype=jnp.float32)
    # Row-normalized random adjacency (values don't need mesh structure).
    adj_raw = jax.random.uniform(k_adj, (B, N, N), dtype=jnp.float32)
    adj = adj_raw / jnp.sum(adj_raw, axis=-1, keepdims=True)

    weight, bias = init_mesh_conv_params(k_par, C_in, C_out)

    out = mesh_conv(ft, adj, weight, bias)
    out = jax.block_until_ready(out)

    ref = mesh_conv_reference(ft, adj, weight, bias)
    assert out.shape == (B, N, C_out)
    # bf16 MXU inputs with f32 accumulation -> slightly relaxed tolerance.
    assert jnp.allclose(out, ref, atol=2e-2, rtol=2e-2)

    print("KERNEL_OK")
</pallas_src>

<mosaic_0001>
module attributes {stable_mosaic.version = 11 : i64} {
  func.func @mesh_conv_kernel(%arg0: i32, %arg1: i32, %arg2: i32, %arg3: memref<1x16x16xbf16, #tpu.memory_space<vmem>>, %arg4: memref<1x16x4xbf16, #tpu.memory_space<vmem>>, %arg5: memref<4x128xf32, #tpu.memory_space<vmem>>, %arg6: memref<1x128xf32, #tpu.memory_space<vmem>>, %arg7: memref<1x16x128xf32, #tpu.memory_space<vmem>>, %arg8: memref<16x4xf32, #tpu.memory_space<vmem>>) attributes {dimension_semantics = [#tpu.dimension_semantics<parallel>, #tpu.dimension_semantics<parallel>, #tpu.dimension_semantics<arbitrary>], iteration_bounds = array<i64: 2, 1, 1>, scalar_prefetch = 0 : i64, scratch_operands = 1 : i64, tpu.core_type = #tpu.core_type<tc>, window_params = [{transform_indices = @transform_0, window_bounds = array<i64: 1, 16, 16>}, {transform_indices = @transform_1, window_bounds = array<i64: 1, 16, 4>}, {pipeline_mode = #tpu.pipeline_mode<synchronous>, transform_indices = @transform_2, window_bounds = array<i64: 4, 128>}, {pipeline_mode = #tpu.pipeline_mode<synchronous>, transform_indices = @transform_3, window_bounds = array<i64: 1, 128>}, {transform_indices = @transform_4, window_bounds = array<i64: 1, 16, 128>}]} {
    %c0_i32 = arith.constant 0 : i32
    %0 = arith.cmpi eq, %arg2, %c0_i32 : i32
    %1 = arith.extui %0 : i1 to i32
    %c0_i32_0 = arith.constant 0 : i32
    %2 = arith.cmpi ne, %1, %c0_i32_0 : i32
    scf.if %2 {
      %cst_12 = arith.constant 0.000000e+00 : f32
      %14 = vector.broadcast %cst_12 : f32 to vector<16x4xf32>
      %c0_13 = arith.constant 0 : index
      %c0_14 = arith.constant 0 : index
      %15 = vector.load %arg8[%c0_13, %c0_14] : memref<16x4xf32, #tpu.memory_space<vmem>>, vector<16x4xf32>
      tpu.vector_store %arg8[%c0_13, %c0_14], %14 {strides = array<i32>} : memref<16x4xf32, #tpu.memory_space<vmem>>, vector<16x4xf32>,
    } else {
    }
    %c0 = arith.constant 0 : index
    %c0_1 = arith.constant 0 : index
    %3 = vector.load %arg8[%c0, %c0_1] : memref<16x4xf32, #tpu.memory_space<vmem>>, vector<16x4xf32>
    %c0_2 = arith.constant 0 : index
    %c0_3 = arith.constant 0 : index
    %c0_4 = arith.constant 0 : index
    %4 = vector.load %arg3[%c0_2, %c0_3, %c0_4] : memref<1x16x16xbf16, #tpu.memory_space<vmem>>, vector<1x16x16xbf16>
    %5 = vector.shape_cast %4 : vector<1x16x16xbf16> to vector<16x16xbf16>
    %c0_5 = arith.constant 0 : index
    %c0_6 = arith.constant 0 : index
    %c0_7 = arith.constant 0 : index
    %6 = vector.load %arg4[%c0_5, %c0_6, %c0_7] : memref<1x16x4xbf16, #tpu.memory_space<vmem>>, vector<1x16x4xbf16>
    %7 = vector.shape_cast %6 : vector<1x16x4xbf16> to vector<16x4xbf16>
    %cst = arith.constant dense<0.000000e+00> : vector<16x4xf32>
    %8 = tpu.matmul %5, %7, %cst {dimension_numbers = #tpu.dot_dimension_numbers<[1], [0], [0], [1], [0, 0, 1, 1], [], []>} : vector<16x16xbf16>, vector<16x4xbf16>, vector<16x4xf32> -> vector<16x4xf32>
    %9 = arith.addf %3, %8 : vector<16x4xf32>
    %c0_8 = arith.constant 0 : index
    %c0_9 = arith.constant 0 : index
    %10 = vector.load %arg8[%c0_8, %c0_9] : memref<16x4xf32, #tpu.memory_space<vmem>>, vector<16x4xf32>
    tpu.vector_store %arg8[%c0_8, %c0_9], %9 {strides = array<i32>} : memref<16x4xf32, #tpu.memory_space<vmem>>, vector<16x4xf32>,
    %c0_i32_10 = arith.constant 0 : i32
    %11 = arith.cmpi eq, %arg2, %c0_i32_10 : i32
    %12 = arith.extui %11 : i1 to i32
    %c0_i32_11 = arith.constant 0 : i32
    %13 = arith.cmpi ne, %12, %c0_i32_11 : i32
    scf.if %13 {
      %c0_12 = arith.constant 0 : index
      %c0_13 = arith.constant 0 : index
      %14 = vector.load %arg8[%c0_12, %c0_13] : memref<16x4xf32, #tpu.memory_space<vmem>>, vector<16x4xf32>
      %c0_14 = arith.constant 0 : index
      %c0_15 = arith.constant 0 : index
      %15 = vector.load %arg5[%c0_14, %c0_15] : memref<4x128xf32, #tpu.memory_space<vmem>>, vector<4x128xf32>
      %cst_16 = arith.constant dense<0.000000e+00> : vector<16x128xf32>
      %16 = tpu.matmul %14, %15, %cst_16 {dimension_numbers = #tpu.dot_dimension_numbers<[1], [0], [0], [1], [0, 0, 1, 1], [], []>} : vector<16x4xf32>, vector<4x128xf32>, vector<16x128xf32> -> vector<16x128xf32>
      %c0_17 = arith.constant 0 : index
      %c0_18 = arith.constant 0 : index
      %17 = vector.load %arg6[%c0_17, %c0_18] : memref<1x128xf32, #tpu.memory_space<vmem>>, vector<1x128xf32>
      %18 = vector.broadcast %17 : vector<1x128xf32> to vector<16x128xf32>
      %19 = arith.addf %16, %18 : vector<16x128xf32>
      %cst_19 = arith.constant 0.000000e+00 : f32
      %20 = vector.broadcast %cst_19 : f32 to vector<16x128xf32>
      %21 = arith.maximumf %19, %20 : vector<16x128xf32>
      %c0_20 = arith.constant 0 : index
      %c0_21 = arith.constant 0 : index
      %c0_22 = arith.constant 0 : index
      %22 = vector.load %arg7[%c0_20, %c0_21, %c0_22] : memref<1x16x128xf32, #tpu.memory_space<vmem>>, vector<1x16x128xf32>
      %23 = vector.shape_cast %22 : vector<1x16x128xf32> to vector<16x128xf32>
      %24 = vector.shape_cast %21 : vector<16x128xf32> to vector<1x16x128xf32>
      tpu.vector_store %arg7[%c0_20, %c0_21, %c0_22], %24 {strides = array<i32>} : memref<1x16x128xf32, #tpu.memory_space<vmem>>, vector<1x16x128xf32>,
    } else {
    }
    return
  }
  func.func @transform_0(%arg0: i32, %arg1: i32, %arg2: i32) -> (i32, i32, i32) {
    %c0_i32 = arith.constant 0 : i32
    return %arg0, %arg1, %arg2 : i32, i32, i32
  }
  func.func @transform_1(%arg0: i32, %arg1: i32, %arg2: i32) -> (i32, i32, i32) {
    %c0_i32 = arith.constant 0 : i32
    %c0_i32_0 = arith.constant 0 : i32
    return %arg0, %arg2, %c0_i32 : i32, i32, i32
  }
  func.func @transform_2(%arg0: i32, %arg1: i32, %arg2: i32) -> (i32, i32) {
    %c0_i32 = arith.constant 0 : i32
    %c0_i32_0 = arith.constant 0 : i32
    %c0_i32_1 = arith.constant 0 : i32
    return %c0_i32, %c0_i32_0 : i32, i32
  }
  func.func @transform_3(%arg0: i32, %arg1: i32, %arg2: i32) -> (i32, i32) {
    %c0_i32 = arith.constant 0 : i32
    %c0_i32_0 = arith.constant 0 : i32
    %c0_i32_1 = arith.constant 0 : i32
    return %c0_i32, %c0_i32_0 : i32, i32
  }
  func.func @transform_4(%arg0: i32, %arg1: i32, %arg2: i32) -> (i32, i32, i32) {
    %c0_i32 = arith.constant 0 : i32
    %c0_i32_0 = arith.constant 0 : i32
    return %arg0, %arg1, %c0_i32 : i32, i32, i32
  }
}

</mosaic_0001>

<llo_original>
// kernel: tpu_custom_call.1
$region0: #{tpu_custom_call.1}
  #allocation0 [shape = 'u32[]', space=smem, size = 0x4, offset = 0x4, fixed_abs, tag = 'smem constant byte address 0x4 - core index']
  #allocation1 [shape = 'u32[72,128]{1,0:T(1,128)}', space=vmem, size = 0x9000, scoped, tag = 'internal scratch']
  #allocation2 [shape = 'f32[16,4]{1,0:T(8,128)}', space=vmem, size = 0x2000, scoped, tag = 'scratch operand']
  %s0 = inlined_call_operand.vmem [shape: bf16[2,16,16], index: 0, kind: input, shape index: {}]
  %s1 = inlined_call_operand.vmem [shape: bf16[2,16,4], index: 1, kind: input, shape index: {}]
  %s2 = inlined_call_operand.vmem [shape: f32[4,128], index: 2, kind: input, shape index: {}]
  %s3 = inlined_call_operand.vmem [shape: f32[1,128], index: 3, kind: input, shape index: {}]
  %s4 = inlined_call_operand.hbm [shape: f32[2,16,128], index: 4, kind: output, shape index: {}]
  %s5 = sld [smem:[#allocation0]]
  $region57: #{tpu_custom_call.1} parent=0
    _
  %s7 = ssub.s32 1, %s5
  %s8 = scalar_select 0, %s7, %s5
  $region1: #{tpu_custom_call.1} parent=0
    #allocation3 [shape = 'u8[16384]{0}', space=vmem, size = 0x4000, scoped, tag = 'output window, operand 0']
    #allocation4 [shape = 's32[2]{0}', space=sflag, size = 0x8, scoped, tag = 'scoped memory for tpu_custom_call.1']
    %9 = vsyncpa [#allocation4], 0
    %s10 = scalar_lea.sflag [#allocation4], 1
    %11 = vsyncpa %s10, 0
    loop: start=0, step=1, limit=4
    $region2: #{tpu_custom_call.1} parent=1 // loop_pre_header
      _
    $region3: #{tpu_custom_call.1} parent=1 // loop_header
      %s13 = sphi 0, %s17
      %p14 = scmp.ge.s32.totalorder %s13, 4
      %s20 = sphi 0, %s39
      %s21 = sphi 0, %s35
      %s22 = sphi 0, %s31
      %s23 = sphi 0, %s20
      %s24 = sphi 0, %s21
      %s25 = sphi 0, %s22
      %s26 = sphi 0, %s23
      %s27 = sphi 0, %s24
      %s28 = sphi 0, %s25
      %s46 = sphi 0, %s48
      %s49 = sphi 0, %s46
      %s50 = sphi 0, %s49
      %s66 = sphi 0, %s50
      %s74 = sphi 0, %s76
      %s77 = sphi 0, %s74
      %s78 = sphi 0, %s77
      %s94 = sphi 0, %s78
      %s98 = sphi 0, %s98
      %s100 = sphi 0, %s98
      %s101 = sphi 0, %s100
      %s115 = sphi 0, %s101
      %s119 = sphi 0, %s119
      %s121 = sphi 0, %s119
      %s122 = sphi 0, %s121
      %s136 = sphi 0, %s122
      %s144 = sphi 0, %s146
      %s147 = sphi 0, %s144
      %s148 = sphi 0, %s147
      %s164 = sphi 0, %s148
    $region4: #{tpu_custom_call.1} parent=1 // loop_header_branch
      %16 = sbr.rel (%p14) target = $region8
    $region5: #{tpu_custom_call.1} parent=1 // loop_body
      %s18 = ssub.s32 %s13, 1
      %s19 = ssub.s32 %s13, 2
      %s29 = sadd.s32 1, %s22
      %p30 = scmp.ge.s32.totalorder %s29, 1
      %s31 = scalar_select %p30, 0, %s29
      %s32 = sadd.s32 1, %s21
      %s33 = scalar_select %p30, %s32, %s21
      %p34 = scmp.ge.s32.totalorder %s33, 1
      %s35 = scalar_select %p34, 0, %s33
      %s36 = sadd.s32 1, %s20
      %s37 = scalar_select %p34, %s36, %s20
      %p38 = scmp.ge.s32.totalorder %s37, 2
      %s39 = scalar_select %p38, 0, %s37
      %s40 = ssub.s32 %s20, %s39
      %s41 = ssub.s32 %s21, %s35
      %s42 = sor.u32 %s40, %s41
      %s43 = ssub.s32 %s22, %s31
      %s44 = sor.u32 %s42, %s43
      %p45 = scmp.eq.s32.totalorder %s44, 0
      %s47 = sadd.s32 %s46, 1
      %s48 = scalar_select %p45, %s46, %s47
      %p51 = pneg %p45
      %p52 = scmp.eq.s32.totalorder %s13, 1
      %p53 = por %p51, %p52
      %p54 = scmp.ne.s32.totalorder %s46, %s49
      %p55 = scmp.eq.s32.totalorder %s13, 0
      %p56 = por %p54, %p55
      %p57 = scmp.ne.s32.totalorder %s46, %s49
      %p58 = scmp.eq.s32.totalorder %s18, 1
      %p59 = por %p57, %p58
      %p60 = scmp.ne.s32.totalorder %s49, %s50
      %p61 = scmp.eq.s32.totalorder %s18, 0
      %p62 = por %p60, %p61
      %p63 = scmp.ne.s32.totalorder %s49, %s50
      %p64 = scmp.eq.s32.totalorder %s19, 1
      %p65 = por %p63, %p64
      %p67 = scmp.ne.s32.totalorder %s50, %s66
      %p68 = scmp.eq.s32.totalorder %s19, 0
      %p69 = por %p67, %p68
      %s70 = ssub.s32 %s20, %s39
      %s71 = ssub.s32 %s22, %s31
      %s72 = sor.u32 %s70, %s71
      %p73 = scmp.eq.s32.totalorder %s72, 0
      %s75 = sadd.s32 %s74, 1
      %s76 = scalar_select %p73, %s74, %s75
      %p79 = pneg %p73
      %p80 = scmp.eq.s32.totalorder %s13, 1
      %p81 = por %p79, %p80
      %p82 = scmp.ne.s32.totalorder %s74, %s77
      %p83 = scmp.eq.s32.totalorder %s13, 0
      %p84 = por %p82, %p83
      %p85 = scmp.ne.s32.totalorder %s74, %s77
      %p86 = scmp.eq.s32.totalorder %s18, 1
      %p87 = por %p85, %p86
      %p88 = scmp.ne.s32.totalorder %s77, %s78
      %p89 = scmp.eq.s32.totalorder %s18, 0
      %p90 = por %p88, %p89
      %p91 = scmp.ne.s32.totalorder %s77, %s78
      %p92 = scmp.eq.s32.totalorder %s19, 1
      %p93 = por %p91, %p92
      %p95 = scmp.ne.s32.totalorder %s78, %s94
      %p96 = scmp.eq.s32.totalorder %s19, 0
      %p97 = por %p95, %p96
      %s99 = sadd.s32 %s98, 1
      %p102 = scmp.eq.s32.totalorder %s13, 1
      %p103 = scmp.ne.s32.totalorder %s98, %s100
      %p104 = scmp.eq.s32.totalorder %s13, 0
      %p105 = por %p103, %p104
      %p106 = scmp.ne.s32.totalorder %s98, %s100
      %p107 = scmp.eq.s32.totalorder %s18, 1
      %p108 = por %p106, %p107
      %p109 = scmp.ne.s32.totalorder %s100, %s101
      %p110 = scmp.eq.s32.totalorder %s18, 0
      %p111 = por %p109, %p110
      %p112 = scmp.ne.s32.totalorder %s100, %s101
      %p113 = scmp.eq.s32.totalorder %s19, 1
      %p114 = por %p112, %p113
      %p116 = scmp.ne.s32.totalorder %s101, %s115
      %p117 = scmp.eq.s32.totalorder %s19, 0
      %p118 = por %p116, %p117
      %s120 = sadd.s32 %s119, 1
      %p123 = scmp.eq.s32.totalorder %s13, 1
      %p124 = scmp.ne.s32.totalorder %s119, %s121
      %p125 = scmp.eq.s32.totalorder %s13, 0
      %p126 = por %p124, %p125
      %p127 = scmp.ne.s32.totalorder %s119, %s121
      %p128 = scmp.eq.s32.totalorder %s18, 1
      %p129 = por %p127, %p128
      %p130 = scmp.ne.s32.totalorder %s121, %s122
      %p131 = scmp.eq.s32.totalorder %s18, 0
      %p132 = por %p130, %p131
      %p133 = scmp.ne.s32.totalorder %s121, %s122
      %p134 = scmp.eq.s32.totalorder %s19, 1
      %p135 = por %p133, %p134
      %p137 = scmp.ne.s32.totalorder %s122, %s136
      %p138 = scmp.eq.s32.totalorder %s19, 0
      %p139 = por %p137, %p138
      %s140 = ssub.s32 %s20, %s39
      %s141 = ssub.s32 %s21, %s35
      %s142 = sor.u32 %s140, %s141
      %p143 = scmp.eq.s32.totalorder %s142, 0
      %s145 = sadd.s32 %s144, 1
      %s146 = scalar_select %p143, %s144, %s145
      %p149 = pneg %p143
      %p150 = scmp.eq.s32.totalorder %s13, 1
      %p151 = por %p149, %p150
      %p152 = scmp.ne.s32.totalorder %s144, %s147
      %p153 = scmp.eq.s32.totalorder %s13, 0
      %p154 = por %p152, %p153
      %p155 = scmp.ne.s32.totalorder %s144, %s147
      %p156 = scmp.eq.s32.totalorder %s18, 1
      %p157 = por %p155, %p156
      %p158 = scmp.ne.s32.totalorder %s147, %s148
      %p159 = scmp.eq.s32.totalorder %s18, 0
      %p160 = por %p158, %p159
      %p161 = scmp.ne.s32.totalorder %s147, %s148
      %p162 = scmp.eq.s32.totalorder %s19, 1
      %p163 = por %p161, %p162
      %p165 = scmp.ne.s32.totalorder %s148, %s164
      %p166 = scmp.eq.s32.totalorder %s19, 0
      %p167 = por %p165, %p166
      %p168 = scmp.le.s32.totalorder 1, %s13
      %p169 = scmp.lt.s32.totalorder %s13, 3
      %p170 = pnand %p168, %p169
      %p171 = pneg %p170
      // Predicated region
      $region9: #{tpu_custom_call.1} parent=5 // pred_check
        _
      $region10: #{tpu_custom_call.1} parent=5 // pred_check_branch
        %173 = sbr.rel (%p170) target = $region12
      $region11: #{tpu_custom_call.1} parent=5 // pred_region
        %s174 = ssub.s32 %s13, 1
        // Predicated region
        $region13: #{tpu_custom_call.1} parent=11 // pred_check
          %p175 = pneg %p111
        $region14: #{tpu_custom_call.1} parent=11 // pred_check_branch
          %177 = sbr.rel (%p175) target = $region16
        $region15: #{tpu_custom_call.1} parent=11 // pred_region
          _
        $region16: #{tpu_custom_call.1} parent=11 // pred_fallthru
          _
        // Predicated region
        $region17: #{tpu_custom_call.1} parent=11 // pred_check
          %p178 = pneg %p132
        $region18: #{tpu_custom_call.1} parent=11 // pred_check_branch
          %180 = sbr.rel (%p178) target = $region20
        $region19: #{tpu_custom_call.1} parent=11 // pred_region
          _
        $region20: #{tpu_custom_call.1} parent=11 // pred_fallthru
          _
      $region12: #{tpu_custom_call.1} parent=5 // pred_fallthru
        _
      %p181 = scmp.lt.s32.totalorder %s13, 2
      // Predicated region
      $region21: #{tpu_custom_call.1} parent=5 // pred_check
        %p182 = pneg %p181
      $region22: #{tpu_custom_call.1} parent=5 // pred_check_branch
        %184 = sbr.rel (%p182) target = $region24
      $region23: #{tpu_custom_call.1} parent=5 // pred_region
        // Predicated region
        $region25: #{tpu_custom_call.1} parent=23 // pred_check
          %p185 = pneg %p56
        $region26: #{tpu_custom_call.1} parent=23 // pred_check_branch
          %187 = sbr.rel (%p185) target = $region28
        $region27: #{tpu_custom_call.1} parent=23 // pred_region
          %s188 = smul.u32 2, %s21
          %p189 = scmp.lt.s32.totalorder %s20, 1
          %s190 = scalar_select %p189, %s20, 1
          %p191 = scmp.lt.s32.totalorder %s188, 1
          %s192 = scalar_select %p191, %s188, 1
          %p193 = scmp.lt.s32.totalorder %s22, 0
          %s194 = scalar_select %p193, %s22, 0
          %s195 = sadd.s32 %s194, %s192
          %s196 = smul.addr %s190, 2
          %s197 = sadd.s32 %s195, %s196
          %s198 = smul.addr %s197, 4
          %s199 = scalar_lea.vmem %s0, %s198
          %s200 = smul.u32 2, %s21
        $region28: #{tpu_custom_call.1} parent=23 // pred_fallthru
          _
        // Predicated region
        $region29: #{tpu_custom_call.1} parent=23 // pred_check
          %p201 = pneg %p84
        $region30: #{tpu_custom_call.1} parent=23 // pred_check_branch
          %203 = sbr.rel (%p201) target = $region32
        $region31: #{tpu_custom_call.1} parent=23 // pred_region
          %s204 = smul.u32 2, %s22
          %p205 = scmp.lt.s32.totalorder %s20, 1
          %s206 = scalar_select %p205, %s20, 1
          %p207 = scmp.lt.s32.totalorder %s204, 1
          %s208 = scalar_select %p207, %s204, 1
          %s209 = smul.addr %s206, 2
          %s210 = sadd.s32 %s208, %s209
          %s211 = smul.addr %s210, 4
          %s212 = scalar_lea.vmem %s1, %s211
          %s213 = smul.u32 2, %s22
        $region32: #{tpu_custom_call.1} parent=23 // pred_fallthru
          _
      $region24: #{tpu_custom_call.1} parent=5 // pred_fallthru
        _
      %p214 = scmp.le.s32.totalorder 1, %s13
      %p215 = scmp.lt.s32.totalorder %s13, 3
      %p216 = pnand %p214, %p215
      %p217 = pneg %p216
      // Predicated region
      $region33: #{tpu_custom_call.1} parent=5 // pred_check
        _
      $region34: #{tpu_custom_call.1} parent=5 // pred_check_branch
        %219 = sbr.rel (%p216) target = $region36
      $region35: #{tpu_custom_call.1} parent=5 // pred_region
        %s220 = ssub.s32 %s13, 1
        %s221 = smul.u32 2, %s24
        %p222 = scmp.lt.s32.totalorder %s23, 1
        %s223 = scalar_select %p222, %s23, 1
        %p224 = scmp.lt.s32.totalorder %s221, 1
        %s225 = scalar_select %p224, %s221, 1
        %p226 = scmp.lt.s32.totalorder %s25, 0
        %s227 = scalar_select %p226, %s25, 0
        %s228 = sadd.s32 %s227, %s225
        %s229 = smul.addr %s223, 2
        %s230 = sadd.s32 %s228, %s229
        %s231 = smul.addr %s230, 4
        %s232 = scalar_lea.vmem %s0, %s231
        %p233 = pneg %p62
        %p234 = pneg %p59
        %s235 = smul.u32 2, %s25
        %p236 = scmp.lt.s32.totalorder %s23, 1
        %s237 = scalar_select %p236, %s23, 1
        %p238 = scmp.lt.s32.totalorder %s235, 1
        %s239 = scalar_select %p238, %s235, 1
        %s240 = smul.addr %s237, 2
        %s241 = sadd.s32 %s239, %s240
        %s242 = smul.addr %s241, 4
        %s243 = scalar_lea.vmem %s1, %s242
        %p244 = pneg %p90
        %p245 = pneg %p87
        %p246 = pneg %p111
        %p247 = pneg %p108
        %p248 = pneg %p132
        %p249 = pneg %p129
        %p250 = pneg %p160
        %p251 = pneg %p157
        %s252 = sand.u32 %s147, 1
        %s253 = scalar_lea.sflag [#allocation4], %s252
        %s254 = sand.u32 %s147, 1
        %s255 = smul.addr %s254, 16
        %s256 = scalar_lea.vmem [#allocation3], %s255
        %s257 = smul.u32 2, %s24
        %p258 = scmp.lt.s32.totalorder %s23, 1
        %s259 = scalar_select %p258, %s23, 1
        %p260 = scmp.lt.s32.totalorder %s257, 1
        %s261 = scalar_select %p260, %s257, 1
        %p262 = scmp.lt.s32.totalorder %s25, 0
        %s263 = scalar_select %p262, %s25, 0
        %s264 = sadd.s32 %s263, %s261
        %s265 = smul.addr %s259, 2
        %s266 = sadd.s32 %s264, %s265
        %s267 = smul.addr %s266, 4
        %s268 = scalar_lea.vmem %s0, %s267
        %s269 = smul.u32 2, %s24
        %s270 = smul.u32 2, %s25
        %p271 = scmp.lt.s32.totalorder %s23, 1
        %s272 = scalar_select %p271, %s23, 1
        %p273 = scmp.lt.s32.totalorder %s270, 1
        %s274 = scalar_select %p273, %s270, 1
        %s275 = smul.addr %s272, 2
        %s276 = sadd.s32 %s274, %s275
        %s277 = smul.addr %s276, 4
        %s278 = scalar_lea.vmem %s1, %s277
        %s279 = smul.u32 2, %s25
        %s280 = smul.u32 2, %s24
        %p282 = scmp.eq.s32.totalorder %s25, 0
        // Predicated region
        $region37: #{tpu_custom_call.1} parent=35 // pred_check
          %p283 = pneg %p282
        $region38: #{tpu_custom_call.1} parent=35 // pred_check_branch
          %285 = sbr.rel (%p283) target = $region40
        $region39: #{tpu_custom_call.1} parent=35 // pred_region
          %vm286 = vcmask 31744
          %287 = vst.msk [vmem:[#allocation2] sm:$0xff] %vm286, 0.0
          %288 = vst.msk [vmem:[#allocation2 + $0x8] sm:$0xff] %vm286, 0.0
        $region40: #{tpu_custom_call.1} parent=35 // pred_fallthru
          _
        %v289 = vld [vmem:[#allocation2] sm:$0xff]
        %v290 = vld [vmem:[#allocation2 + $0x8] sm:$0xff]
        %v291 = vld [vmem:[%s268] sm:$0xf]
        %v292 = vld [vmem:[%s268 + $0x4] sm:$0xf]
        %v293 = vld [vmem:[%s278] sm:$0xf]
        %v294 = vld [vmem:[%s278 + $0x4] sm:$0xf]
        %v297 = vunpack.c.l.b16 %v291
        %v298 = vunpack.c.l.b16 %v292
        %v299 = vpack.c.b16 %v298, %v297
        %v302 = vunpack.c.l.b16 %v293
        %v303 = vunpack.c.l.b16 %v294
        %v304 = vpack.c.b16 %v303, %v302
        %vm306 = vcmask 130048
        %v308 = vsel %vm306, %v299, 0
        %310 = vmatpush.bf16.msra.mxu0 0
        %311 = vmatpush.bf16.msra.mxu0 0
        %312 = vmatpush.bf16.msra.mxu0 0
        %313 = vmatpush.bf16.msra.mxu0 0
        %314 = vmatpush.bf16.msra.mxu0 0
        %315 = vmatpush.bf16.msra.mxu0 0
        %316 = vmatpush.bf16.msra.mxu0 0
        %317 = vmatpush.bf16.msra.mxu0 %v304
        %318 = vmatmul.bf16.gmra.mxu0 %v308
        %v319 = vpop.f32.mrf.mxu0
        %v320 = vadd.f32 0.0, %v319
        %v321 = vpop.f32.mrf.mxu0
        %v322 = vadd.f32 0.0, %v321
        %323 = vdwg.mxu0
        %v324 = vadd.f32 %v289, %v320
        %v325 = vadd.f32 %v290, %v322
        %vm326 = vcmask 31744
        %327 = vst.msk [vmem:[#allocation2] sm:$0xff] %vm326, %v324
        %328 = vst.msk [vmem:[#allocation2 + $0x8] sm:$0xff] %vm326, %v325
        // Predicated region
        $region41: #{tpu_custom_call.1} parent=35 // pred_check
          %p329 = pneg %p282
        $region42: #{tpu_custom_call.1} parent=35 // pred_check_branch
          %331 = sbr.rel (%p329) target = $region44
        $region43: #{tpu_custom_call.1} parent=35 // pred_region
          %v332 = vld [vmem:[#allocation2] sm:$0xff]
          %v333 = vld [vmem:[#allocation2 + $0x8] sm:$0xff]
          %v334 = vld [vmem:[%s2] sm:$0xf]
          %v335 = vld [vmem:[%s3] sm:$0x1]
          %v337 = vperm.slane %v335, 0
          %v340 = vsel %vm326, %v332, 0
          %v343 = vsel %vm326, %v333, 0
          %vm345 = vcmask 1043456
          %v347 = vsel %vm345, %v334, 0
          %349 = vmatpush.msra.mxu0 0.0
          %350 = vmatpush.msra.mxu0 0.0
          %351 = vmatpush.msra.mxu0 0.0
          %352 = vmatpush.msra.mxu0 0.0
          %353 = vmatpush.msra.mxu0 0.0
          %354 = vmatpush.msra.mxu0 0.0
          %355 = vmatpush.msra.mxu0 0.0
          %356 = vmatpush.msra.mxu0 0.0
          %357 = vmatpush.msra.mxu0 0.0
          %358 = vmatpush.msra.mxu0 0.0
          %359 = vmatpush.msra.mxu0 0.0
          %360 = vmatpush.msra.mxu0 0.0
          %361 = vmatpush.msra.mxu0 0.0
          %362 = vmatpush.msra.mxu0 0.0
          %363 = vmatpush.msra.mxu0 0.0
          %364 = vmatpush.msra.mxu0 %v347
          %365 = vmatmul.f32.gmra.mxu0 %v340
          %v366 = vpop.f32.mrf.mxu0
          %v367 = vadd.f32 %v337, %v366
          %368 = vmatmul.f32.gmra.mxu0 %v343
          %v369 = vpop.f32.mrf.mxu0
          %v370 = vadd.f32 %v337, %v369
          %371 = vdwg.mxu0
          %v372 = vmax.f32 %v367, 0.0
          %v373 = vmax.f32 %v370, 0.0
          %374 = vst [vmem:[%s256] sm:$0xff] %v372
          %375 = vst [vmem:[%s256 + $0x8] sm:$0xff] %v373
        $region44: #{tpu_custom_call.1} parent=35 // pred_fallthru
          _
        %s376 = sand.u32 %s147, 1
        %s377 = scalar_lea.sflag [#allocation4], %s376
        %s378 = sand.u32 %s147, 1
        %s379 = smul.addr %s378, 16
        %s380 = scalar_lea.vmem [#allocation3], %s379
        // Predicated region
        $region45: #{tpu_custom_call.1} parent=35 // pred_check
          %p381 = pneg %p157
        $region46: #{tpu_custom_call.1} parent=35 // pred_check_branch
          %383 = sbr.rel (%p381) target = $region48
        $region47: #{tpu_custom_call.1} parent=35 // pred_region
          %s384 = smul.u32 2, %s24
          %386 = vsyncadd %s377, 0
          %s387 = smul.addr %s23, 2
          %s388 = sadd.s32 %s384, %s387
          %s389 = smul.addr %s388, 8
          %s390 = scalar_lea.hbm %s4, %s389
          %s391 = sshll.u32 %s380, 4
          %s392 = int_to_ptr.vmem [resolvable:$true] %s391
          %s393 = sshll.u32 %s390, 4
          %s394 = int_to_ptr.hbm [resolvable:$true] %s393
          %399 = dma.vmem_to_hbm [thread:$0]  %s392, 256, %s394, %s377, 128, 128, 8
        $region48: #{tpu_custom_call.1} parent=35 // pred_fallthru
          _
      $region36: #{tpu_custom_call.1} parent=5 // pred_fallthru
        _
      %p400 = scmp.le.s32.totalorder 2, %s13
      // Predicated region
      $region49: #{tpu_custom_call.1} parent=5 // pred_check
        %p401 = pneg %p400
      $region50: #{tpu_custom_call.1} parent=5 // pred_check_branch
        %403 = sbr.rel (%p401) target = $region52
      $region51: #{tpu_custom_call.1} parent=5 // pred_region
        %s404 = ssub.s32 %s13, 2
        // Predicated region
        $region53: #{tpu_custom_call.1} parent=51 // pred_check
          %p405 = pneg %p163
        $region54: #{tpu_custom_call.1} parent=51 // pred_check_branch
          %407 = sbr.rel (%p405) target = $region56
        $region55: #{tpu_custom_call.1} parent=51 // pred_region
          %s408 = sand.u32 %s148, 1
          %s409 = scalar_lea.sflag [#allocation4], %s408
          %s410 = sand.u32 %s148, 1
          %s411 = smul.addr %s410, 16
          %s412 = scalar_lea.vmem [#allocation3], %s411
          %414 = dma.done %s409, 256
        $region56: #{tpu_custom_call.1} parent=51 // pred_fallthru
          _
      $region52: #{tpu_custom_call.1} parent=5 // pred_fallthru
        _
    $region6: #{tpu_custom_call.1} parent=1 // loop_footer
      %s17 = sadd.s32 1, %s13
    $region7: #{tpu_custom_call.1} parent=1 // loop_footer_branch
      %12 = sbr.rel target = $region3
    $region8: #{tpu_custom_call.1} parent=1 // loop_exit
      _
    %415 = vsyncpa [#allocation4], 1
    %s416 = scalar_lea.sflag [#allocation4], 1
    %417 = vsyncpa %s416, 1

</llo_original>
